<compile_context>
chip_gen: v7x
topology: tpu7x:2x2x1
jax: 0.10.0
libtpu: 0.0.40
codegen_flags: <defaults>
</compile_context>

<pallas_src>
import jax
import jax.numpy as jnp
from jax.experimental import pallas as pl
from jax.experimental.pallas import tpu as pltpu

IN_DIM = 172 + 7          # 179
HID = 256
OUT_DIM = 1
LANE = 128
TB_MAX = 512              # batch tile (rows); always a multiple of 128


def _round_up(n, m):
    return ((n + m - 1) // m) * m


def _mlp_kernel(x_ref, w1_ref, b1_ref, w2_ref, b2_ref, w3_ref, b3_ref, o_ref):
    # fc1: cast the f32 activations to bf16 in VMEM (VPU) and run the MXU with
    # f32 accumulation (K = 179 is handled/masked by Mosaic).  Bias + ReLU in f32.
    x = x_ref[...].astype(w1_ref.dtype)
    h1 = jnp.dot(x, w1_ref[...], preferred_element_type=jnp.float32)
    h1 = jnp.maximum(h1 + b1_ref[...], 0.0)

    # fc2: cast activations back to bf16 for the MXU, accumulate in f32.
    h2 = jnp.dot(h1.astype(w2_ref.dtype), w2_ref[...],
                 preferred_element_type=jnp.float32)
    h2 = jnp.maximum(h2 + b2_ref[...], 0.0)

    # fc3 (N=1): avoid an N=1 MXU pass -> VPU multiply + lane reduction.
    # View h2 (TB, HID) as (TB//128, 128, HID) so the reduced result lands
    # lane-dense as (TB//128, 128) instead of a masked (TB, 1) column store.
    tb = h2.shape[0]
    h2g = h2.reshape(tb // LANE, LANE, HID)
    y = jnp.sum(h2g * w3_ref[...], axis=-1) + b3_ref[...]      # (TB//128, 128) f32
    o_ref[...] = y.reshape(o_ref.shape).astype(o_ref.dtype)


@jax.jit
def declaration_model_forward(x, w1, b1, w2, b2, w3, b3):
    B = x.shape[0]
    # Batch tile: up to 512 rows, always a multiple of 128 (lane-dense output).
    tb = TB_MAX if B >= TB_MAX else _round_up(B, LANE)
    b_pad = _round_up(B, tb)
    grid = (b_pad // tb,)
    gb = tb // LANE                       # lane-dense output rows per tile

    # Only pad the batch dim when needed; x otherwise streams straight from HBM
    # (no K padding, no dtype cast in the wrapper).
    xp = x if b_pad == B else jnp.pad(x, ((0, b_pad - B), (0, 0)))

    # Weights cast once per call (tiny); the per-grid-step cost is zero because
    # their block index never changes, so Pallas fetches them a single time.
    w1b = w1.astype(jnp.bfloat16)
    w2b = w2.astype(jnp.bfloat16)

    # Biases as broadcastable rows; fc3 weight as a (1, HID) row for the VPU path.
    b1r = b1.reshape(1, HID).astype(jnp.float32)
    b2r = b2.reshape(1, HID).astype(jnp.float32)
    w3r = w3.reshape(1, HID).astype(jnp.float32)
    b3r = b3.reshape(1, 1).astype(jnp.float32)

    out = pl.pallas_call(
        _mlp_kernel,
        out_shape=jax.ShapeDtypeStruct((grid[0], gb, LANE), jnp.float32),
        grid_spec=pltpu.PrefetchScalarGridSpec(
            num_scalar_prefetch=0,
            grid=grid,
            in_specs=[
                pl.BlockSpec((tb, IN_DIM), lambda i: (i, 0)),    # x tile   (f32)
                pl.BlockSpec((IN_DIM, HID), lambda i: (0, 0)),   # w1       (bf16)
                pl.BlockSpec((1, HID), lambda i: (0, 0)),        # b1       (f32)
                pl.BlockSpec((HID, HID), lambda i: (0, 0)),      # w2       (bf16)
                pl.BlockSpec((1, HID), lambda i: (0, 0)),        # b2       (f32)
                pl.BlockSpec((1, HID), lambda i: (0, 0)),        # w3 row   (f32)
                pl.BlockSpec((1, 1), lambda i: (0, 0)),          # b3       (f32)
            ],
            out_specs=pl.BlockSpec((1, gb, LANE), lambda i: (i, 0, 0)),
        ),
        compiler_params=pltpu.CompilerParams(
            dimension_semantics=("parallel",)),
    )(xp, w1b, b1r, w2b, b2r, w3r, b3r)

    # Lane-dense slabs back to (B, 1).
    return out.reshape(b_pad, OUT_DIM)[:B]


def init_params(key):
    """Deterministic init mirroring nn.Linear's U(-1/sqrt(fan_in), 1/sqrt(fan_in))."""
    k1, k2, k3, k4, k5, k6 = jax.random.split(key, 6)

    def lin(kw, kb, fan_in, fan_out):
        bound = 1.0 / jnp.sqrt(fan_in)
        w = jax.random.uniform(kw, (fan_in, fan_out), jnp.float32, -bound, bound)
        b = jax.random.uniform(kb, (fan_out,), jnp.float32, -bound, bound)
        return w, b

    w1, b1 = lin(k1, k2, IN_DIM, HID)
    w2, b2 = lin(k3, k4, HID, HID)
    w3, b3 = lin(k5, k6, HID, OUT_DIM)
    return w1, b1, w2, b2, w3, b3


def _reference_bf16(x, w1, b1, w2, b2, w3, b3):
    """Reference matching kernel numerics (bf16 matmul operands, f32 accumulation)."""
    xb = x.astype(jnp.bfloat16)
    h1 = jnp.maximum(
        jnp.dot(xb, w1.astype(jnp.bfloat16), preferred_element_type=jnp.float32) + b1, 0.0)
    h2 = jnp.maximum(
        jnp.dot(h1.astype(jnp.bfloat16), w2.astype(jnp.bfloat16),
                preferred_element_type=jnp.float32) + b2, 0.0)
    return jnp.dot(h2, w3) + b3


def _reference_f32(x, w1, b1, w2, b2, w3, b3):
    h = jnp.maximum(x @ w1 + b1, 0.0)
    h = jnp.maximum(h @ w2 + b2, 0.0)
    return h @ w3 + b3


if __name__ == "__main__":
    key = jax.random.PRNGKey(0)
    kx, kx2, kp = jax.random.split(key, 3)
    params = init_params(kp)

    # Small batch (single tile, padded to 128 rows).
    B = 2
    x = jax.random.normal(kx, (B, IN_DIM), jnp.float32)
    out = jax.block_until_ready(declaration_model_forward(x, *params))
    assert out.shape == (B, OUT_DIM)
    assert jnp.allclose(out, _reference_bf16(x, *params), atol=2e-3, rtol=2e-3)
    assert jnp.allclose(out, _reference_f32(x, *params), atol=5e-2, rtol=5e-2)

    # Larger batch exercising multiple grid steps and a partial final tile.
    B2 = 700
    x2 = jax.random.normal(kx2, (B2, IN_DIM), jnp.float32)
    out2 = jax.block_until_ready(declaration_model_forward(x2, *params))
    assert out2.shape == (B2, OUT_DIM)
    assert jnp.allclose(out2, _reference_bf16(x2, *params), atol=2e-3, rtol=2e-3)
    assert jnp.allclose(out2, _reference_f32(x2, *params), atol=5e-2, rtol=5e-2)

    print("KERNEL_OK")
</pallas_src>

<mosaic_0001>
module attributes {stable_mosaic.version = 11 : i64} {
  func.func @_mlp_kernel(%arg0: i32, %arg1: memref<128x179xf32, #tpu.memory_space<vmem>>, %arg2: memref<179x256xbf16, #tpu.memory_space<vmem>>, %arg3: memref<1x256xf32, #tpu.memory_space<vmem>>, %arg4: memref<256x256xbf16, #tpu.memory_space<vmem>>, %arg5: memref<1x256xf32, #tpu.memory_space<vmem>>, %arg6: memref<1x256xf32, #tpu.memory_space<vmem>>, %arg7: memref<1x1xf32, #tpu.memory_space<vmem>>, %arg8: memref<1x1x128xf32, #tpu.memory_space<vmem>>) attributes {dimension_semantics = [#tpu.dimension_semantics<parallel>], iteration_bounds = array<i64: 1>, scalar_prefetch = 0 : i64, scratch_operands = 0 : i64, tpu.core_type = #tpu.core_type<tc>, window_params = [{transform_indices = @transform_0, window_bounds = array<i64: 128, 179>}, {pipeline_mode = #tpu.pipeline_mode<synchronous>, transform_indices = @transform_1, window_bounds = array<i64: 179, 256>}, {pipeline_mode = #tpu.pipeline_mode<synchronous>, transform_indices = @transform_2, window_bounds = array<i64: 1, 256>}, {pipeline_mode = #tpu.pipeline_mode<synchronous>, transform_indices = @transform_3, window_bounds = array<i64: 256, 256>}, {pipeline_mode = #tpu.pipeline_mode<synchronous>, transform_indices = @transform_4, window_bounds = array<i64: 1, 256>}, {pipeline_mode = #tpu.pipeline_mode<synchronous>, transform_indices = @transform_5, window_bounds = array<i64: 1, 256>}, {pipeline_mode = #tpu.pipeline_mode<synchronous>, transform_indices = @transform_6, window_bounds = array<i64: 1, 1>}, {transform_indices = @transform_7, window_bounds = array<i64: 1, 1, 128>}]} {
    %c0 = arith.constant 0 : index
    %c0_0 = arith.constant 0 : index
    %0 = vector.load %arg1[%c0, %c0_0] : memref<128x179xf32, #tpu.memory_space<vmem>>, vector<128x179xf32>
    %1 = arith.truncf %0 : vector<128x179xf32> to vector<128x179xbf16>
    %c0_1 = arith.constant 0 : index
    %c0_2 = arith.constant 0 : index
    %2 = vector.load %arg2[%c0_1, %c0_2] : memref<179x256xbf16, #tpu.memory_space<vmem>>, vector<179x256xbf16>
    %cst = arith.constant dense<0.000000e+00> : vector<128x256xf32>
    %3 = tpu.matmul %1, %2, %cst {dimension_numbers = #tpu.dot_dimension_numbers<[1], [0], [0], [1], [0, 0, 1, 1], [], []>} : vector<128x179xbf16>, vector<179x256xbf16>, vector<128x256xf32> -> vector<128x256xf32>
    %c0_3 = arith.constant 0 : index
    %c0_4 = arith.constant 0 : index
    %4 = vector.load %arg3[%c0_3, %c0_4] : memref<1x256xf32, #tpu.memory_space<vmem>>, vector<1x256xf32>
    %5 = vector.broadcast %4 : vector<1x256xf32> to vector<128x256xf32>
    %6 = arith.addf %3, %5 : vector<128x256xf32>
    %cst_5 = arith.constant 0.000000e+00 : f32
    %7 = vector.broadcast %cst_5 : f32 to vector<128x256xf32>
    %8 = arith.maximumf %6, %7 : vector<128x256xf32>
    %9 = arith.truncf %8 : vector<128x256xf32> to vector<128x256xbf16>
    %c0_6 = arith.constant 0 : index
    %c0_7 = arith.constant 0 : index
    %10 = vector.load %arg4[%c0_6, %c0_7] : memref<256x256xbf16, #tpu.memory_space<vmem>>, vector<256x256xbf16>
    %cst_8 = arith.constant dense<0.000000e+00> : vector<128x256xf32>
    %11 = tpu.matmul %9, %10, %cst_8 {dimension_numbers = #tpu.dot_dimension_numbers<[1], [0], [0], [1], [0, 0, 1, 1], [], []>} : vector<128x256xbf16>, vector<256x256xbf16>, vector<128x256xf32> -> vector<128x256xf32>
    %c0_9 = arith.constant 0 : index
    %c0_10 = arith.constant 0 : index
    %12 = vector.load %arg5[%c0_9, %c0_10] : memref<1x256xf32, #tpu.memory_space<vmem>>, vector<1x256xf32>
    %13 = vector.broadcast %12 : vector<1x256xf32> to vector<128x256xf32>
    %14 = arith.addf %11, %13 : vector<128x256xf32>
    %cst_11 = arith.constant 0.000000e+00 : f32
    %15 = vector.broadcast %cst_11 : f32 to vector<128x256xf32>
    %16 = arith.maximumf %14, %15 : vector<128x256xf32>
    %17 = vector.shape_cast %16 : vector<128x256xf32> to vector<1x128x256xf32>
    %c0_12 = arith.constant 0 : index
    %c0_13 = arith.constant 0 : index
    %18 = vector.load %arg6[%c0_12, %c0_13] : memref<1x256xf32, #tpu.memory_space<vmem>>, vector<1x256xf32>
    %19 = vector.shape_cast %18 : vector<1x256xf32> to vector<1x1x256xf32>
    %20 = vector.broadcast %19 : vector<1x1x256xf32> to vector<1x128x256xf32>
    %21 = arith.mulf %17, %20 : vector<1x128x256xf32>
    %cst_14 = arith.constant dense<0.000000e+00> : vector<1x128xf32>
    %22 = vector.multi_reduction <add>, %21, %cst_14 [2] : vector<1x128x256xf32> to vector<1x128xf32>
    %c0_15 = arith.constant 0 : index
    %c0_16 = arith.constant 0 : index
    %23 = vector.load %arg7[%c0_15, %c0_16] : memref<1x1xf32, #tpu.memory_space<vmem>>, vector<1x1xf32>
    %24 = vector.broadcast %23 : vector<1x1xf32> to vector<1x128xf32>
    %25 = arith.addf %22, %24 : vector<1x128xf32>
    %26 = vector.shape_cast %25 : vector<1x128xf32> to vector<1x1x128xf32>
    %c0_17 = arith.constant 0 : index
    %c0_18 = arith.constant 0 : index
    %c0_19 = arith.constant 0 : index
    %27 = vector.load %arg8[%c0_17, %c0_18, %c0_19] : memref<1x1x128xf32, #tpu.memory_space<vmem>>, vector<1x1x128xf32>
    tpu.vector_store %arg8[%c0_17, %c0_18, %c0_19], %26 {strides = array<i32>} : memref<1x1x128xf32, #tpu.memory_space<vmem>>, vector<1x1x128xf32>,
    return
  }
  func.func @transform_0(%arg0: i32) -> (i32, i32) {
    %c0_i32 = arith.constant 0 : i32
    %c0_i32_0 = arith.constant 0 : i32
    return %arg0, %c0_i32 : i32, i32
  }
  func.func @transform_1(%arg0: i32) -> (i32, i32) {
    %c0_i32 = arith.constant 0 : i32
    %c0_i32_0 = arith.constant 0 : i32
    %c0_i32_1 = arith.constant 0 : i32
    return %c0_i32, %c0_i32_0 : i32, i32
  }
  func.func @transform_2(%arg0: i32) -> (i32, i32) {
    %c0_i32 = arith.constant 0 : i32
    %c0_i32_0 = arith.constant 0 : i32
    %c0_i32_1 = arith.constant 0 : i32
    return %c0_i32, %c0_i32_0 : i32, i32
  }
  func.func @transform_3(%arg0: i32) -> (i32, i32) {
    %c0_i32 = arith.constant 0 : i32
    %c0_i32_0 = arith.constant 0 : i32
    %c0_i32_1 = arith.constant 0 : i32
    return %c0_i32, %c0_i32_0 : i32, i32
  }
  func.func @transform_4(%arg0: i32) -> (i32, i32) {
    %c0_i32 = arith.constant 0 : i32
    %c0_i32_0 = arith.constant 0 : i32
    %c0_i32_1 = arith.constant 0 : i32
    return %c0_i32, %c0_i32_0 : i32, i32
  }
  func.func @transform_5(%arg0: i32) -> (i32, i32) {
    %c0_i32 = arith.constant 0 : i32
    %c0_i32_0 = arith.constant 0 : i32
    %c0_i32_1 = arith.constant 0 : i32
    return %c0_i32, %c0_i32_0 : i32, i32
  }
  func.func @transform_6(%arg0: i32) -> (i32, i32) {
    %c0_i32 = arith.constant 0 : i32
    %c0_i32_0 = arith.constant 0 : i32
    %c0_i32_1 = arith.constant 0 : i32
    return %c0_i32, %c0_i32_0 : i32, i32
  }
  func.func @transform_7(%arg0: i32) -> (i32, i32, i32) {
    %c0_i32 = arith.constant 0 : i32
    %c0_i32_0 = arith.constant 0 : i32
    %c0_i32_1 = arith.constant 0 : i32
    return %arg0, %c0_i32, %c0_i32_0 : i32, i32, i32
  }
}

</mosaic_0001>

<llo_original>
// kernel: declaration_model_forward.1
$region0: #{declaration_model_forward.1}
  #allocation0 [shape = 'u32[]', space=smem, size = 0x4, offset = 0x4, fixed_abs, tag = 'smem constant byte address 0x4 - core index']
  #allocation1 [shape = 'u32[144,128]{1,0:T(1,128)}', space=vmem, size = 0x12000, scoped, tag = 'internal scratch']
  #allocation2 [shape = 'f32[1,1]{1,0:T(1,128)S(1)}', space=vmem, size = 0x200, scoped, tag = 'scoped memory for declaration_model_forward.1']
  %s0 = inlined_call_operand.vmem [shape: f32[128,179], index: 0, kind: input, shape index: {}]
  %s1 = inlined_call_operand.vmem [shape: bf16[179,256], index: 1, kind: input, shape index: {}]
  %s2 = inlined_call_operand.vmem [shape: f32[1,256], index: 2, kind: input, shape index: {}]
  %s3 = inlined_call_operand.vmem [shape: bf16[256,256], index: 3, kind: input, shape index: {}]
  %s4 = inlined_call_operand.vmem [shape: f32[1,256], index: 4, kind: input, shape index: {}]
  %s5 = inlined_call_operand.vmem [shape: f32[1,256], index: 5, kind: input, shape index: {}]
  %s6 = inlined_call_operand.<no memory space> [shape: f32[1,1], index: 6, kind: input, shape index: {}]
  %s7 = inlined_call_operand.vmem [shape: f32[1,1,128], index: 7, kind: output, shape index: {}]
  %s8 = sld [smem:[#allocation0]]
  $region38: #{declaration_model_forward.1} parent=0
    _
  %s10 = ssub.s32 1, %s8
  %s11 = scalar_select 0, %s10, %s8
  %v12 = vstv %s6
  %13 = vst [vmem:[#allocation2] sm:$0x1] %v12
  // Predicated region
  $region2: #{declaration_model_forward.1} parent=0 // pred_check
    _
  $region3: #{declaration_model_forward.1} parent=0 // pred_check_branch
    %15 = sbr.rel (0) target = $region5
  $region4: #{declaration_model_forward.1} parent=0 // pred_region
    _
  $region5: #{declaration_model_forward.1} parent=0 // pred_fallthru
    _
  // Predicated region
  $region6: #{declaration_model_forward.1} parent=0 // pred_check
    _
  $region7: #{declaration_model_forward.1} parent=0 // pred_check_branch
    %17 = sbr.rel (0) target = $region9
  $region8: #{declaration_model_forward.1} parent=0 // pred_region
    _
  $region9: #{declaration_model_forward.1} parent=0 // pred_fallthru
    _
  // Predicated region
  $region10: #{declaration_model_forward.1} parent=0 // pred_check
    _
  $region11: #{declaration_model_forward.1} parent=0 // pred_check_branch
    %19 = sbr.rel (0) target = $region13
  $region12: #{declaration_model_forward.1} parent=0 // pred_region
    _
  $region13: #{declaration_model_forward.1} parent=0 // pred_fallthru
    _
  // Predicated region
  $region14: #{declaration_model_forward.1} parent=0 // pred_check
    _
  $region15: #{declaration_model_forward.1} parent=0 // pred_check_branch
    %21 = sbr.rel (0) target = $region17
  $region16: #{declaration_model_forward.1} parent=0 // pred_region
    _
  $region17: #{declaration_model_forward.1} parent=0 // pred_fallthru
    _
  // Predicated region
  $region18: #{declaration_model_forward.1} parent=0 // pred_check
    _
  $region19: #{declaration_model_forward.1} parent=0 // pred_check_branch
    %23 = sbr.rel (0) target = $region21
  $region20: #{declaration_model_forward.1} parent=0 // pred_region
    _
  $region21: #{declaration_model_forward.1} parent=0 // pred_fallthru
    _
  // Predicated region
  $region22: #{declaration_model_forward.1} parent=0 // pred_check
    _
  $region23: #{declaration_model_forward.1} parent=0 // pred_check_branch
    %25 = sbr.rel (0) target = $region25
  $region24: #{declaration_model_forward.1} parent=0 // pred_region
    _
  $region25: #{declaration_model_forward.1} parent=0 // pred_fallthru
    _
  // Predicated region
  $region26: #{declaration_model_forward.1} parent=0 // pred_check
    _
  $region27: #{declaration_model_forward.1} parent=0 // pred_check_branch
    %27 = sbr.rel (0) target = $region29
  $region28: #{declaration_model_forward.1} parent=0 // pred_region
    _
  $region29: #{declaration_model_forward.1} parent=0 // pred_fallthru
    _
  %v29 = vld [vmem:[%s0] sm:$0xff]
  %v30 = vld [vmem:[%s0 + $0x8] sm:$0xff]
  %v31 = vld [vmem:[%s0 + $0x10] sm:$0xff]
  %v32 = vld [vmem:[%s0 + $0x18] sm:$0xff]
  %v33 = vld [vmem:[%s0 + $0x20] sm:$0xff]
  %v34 = vld [vmem:[%s0 + $0x28] sm:$0xff]
  %v35 = vld [vmem:[%s0 + $0x30] sm:$0xff]
  %v36 = vld [vmem:[%s0 + $0x38] sm:$0xff]
  %v37 = vld [vmem:[%s0 + $0x40] sm:$0xff]
  %v38 = vld [vmem:[%s0 + $0x48] sm:$0xff]
  %v39 = vld [vmem:[%s0 + $0x50] sm:$0xff]
  %v40 = vld [vmem:[%s0 + $0x58] sm:$0xff]
  %v41 = vld [vmem:[%s0 + $0x60] sm:$0xff]
  %v42 = vld [vmem:[%s0 + $0x68] sm:$0xff]
  %v43 = vld [vmem:[%s0 + $0x70] sm:$0xff]
  %v44 = vld [vmem:[%s0 + $0x78] sm:$0xff]
  %v45 = vld [vmem:[%s0 + $0x80] sm:$0xff]
  %v46 = vld [vmem:[%s0 + $0x88] sm:$0xff]
  %v47 = vld [vmem:[%s0 + $0x90] sm:$0xff]
  %v48 = vld [vmem:[%s0 + $0x98] sm:$0xff]
  %v49 = vld [vmem:[%s0 + $0xa0] sm:$0xff]
  %v50 = vld [vmem:[%s0 + $0xa8] sm:$0xff]
  %v51 = vld [vmem:[%s0 + $0xb0] sm:$0xff]
  %v52 = vld [vmem:[%s0 + $0xb8] sm:$0xff]
  %v53 = vld [vmem:[%s0 + $0xc0] sm:$0xff]
  %v54 = vld [vmem:[%s0 + $0xc8] sm:$0xff]
  %v55 = vld [vmem:[%s0 + $0xd0] sm:$0xff]
  %v56 = vld [vmem:[%s0 + $0xd8] sm:$0xff]
  %v57 = vld [vmem:[%s0 + $0xe0] sm:$0xff]
  %v58 = vld [vmem:[%s0 + $0xe8] sm:$0xff]
  %v59 = vld [vmem:[%s0 + $0xf0] sm:$0xff]
  %v60 = vld [vmem:[%s0 + $0xf8] sm:$0xff]
  %v61 = vpack.c.bf16 %v31, %v29
  %v62 = vpack.c.bf16 %v32, %v30
  %v63 = vpack.c.bf16 %v35, %v33
  %v64 = vpack.c.bf16 %v36, %v34
  %v65 = vpack.c.bf16 %v39, %v37
  %v66 = vpack.c.bf16 %v40, %v38
  %v67 = vpack.c.bf16 %v43, %v41
  %v68 = vpack.c.bf16 %v44, %v42
  %v69 = vpack.c.bf16 %v47, %v45
  %v70 = vpack.c.bf16 %v48, %v46
  %v71 = vpack.c.bf16 %v51, %v49
  %v72 = vpack.c.bf16 %v52, %v50
  %v73 = vpack.c.bf16 %v55, %v53
  %v74 = vpack.c.bf16 %v56, %v54
  %v75 = vpack.c.bf16 %v59, %v57
  %v76 = vpack.c.bf16 %v60, %v58
  %v77 = vld [vmem:[%s1] sm:$0xff]
  %v78 = vld [vmem:[%s1 + $0x8] sm:$0xff]
  %v79 = vld [vmem:[%s1 + $0x10] sm:$0xff]
  %v80 = vld [vmem:[%s1 + $0x18] sm:$0xff]
  %v81 = vld [vmem:[%s1 + $0x20] sm:$0xff]
  %v82 = vld [vmem:[%s1 + $0x28] sm:$0xff]
  %v83 = vld [vmem:[%s1 + $0x30] sm:$0xff]
  %v84 = vld [vmem:[%s1 + $0x38] sm:$0xff]
  %v85 = vld [vmem:[%s1 + $0x40] sm:$0xff]
  %v86 = vld [vmem:[%s1 + $0x48] sm:$0xff]
  %v87 = vld [vmem:[%s1 + $0x50] sm:$0xff]
  %v88 = vld [vmem:[%s1 + $0x58] sm:$0xff]
  %v89 = vld [vmem:[%s1 + $0x60] sm:$0xff]
  %v90 = vld [vmem:[%s1 + $0x68] sm:$0xff]
  %v91 = vld [vmem:[%s1 + $0x70] sm:$0xff]
  %v92 = vld [vmem:[%s1 + $0x78] sm:$0xff]
  %v93 = vld [vmem:[%s1 + $0x80] sm:$0xff]
  %v94 = vld [vmem:[%s1 + $0x88] sm:$0xff]
  %v95 = vld [vmem:[%s1 + $0x90] sm:$0xff]
  %v96 = vld [vmem:[%s1 + $0x98] sm:$0xff]
  %v97 = vld [vmem:[%s1 + $0xa0] sm:$0xff]
  %v98 = vld [vmem:[%s1 + $0xa8] sm:$0xff]
  %v99 = vld [vmem:[%s1 + $0xb0] sm:$0x33]
  %v100 = vld [vmem:[%s2] sm:$0x3]
  %v102 = vlaneseq
  %v103 = vshrl.u32 %v102, 7
  %v104 = vsub.s32 0, %v103
  %v105 = vrot.slane %v100, %v104
  %v106 = vlaneseq
  %v107 = vshrl.u32 %v106, 7
  %v108 = vsub.s32 1, %v107
  %v109 = vrot.slane %v100, %v108
  %v135 = vunpack.c.l.b16 %v77
  %v136 = vunpack.c.h.b16 %v77
  %v137 = vunpack.c.l.b16 %v78
  %v138 = vunpack.c.h.b16 %v78
  %v139 = vunpack.c.l.b16 %v79
  %v140 = vunpack.c.h.b16 %v79
  %v141 = vunpack.c.l.b16 %v80
  %v142 = vunpack.c.h.b16 %v80
  %v143 = vunpack.c.l.b16 %v81
  %v144 = vunpack.c.h.b16 %v81
  %v145 = vunpack.c.l.b16 %v82
  %v146 = vunpack.c.h.b16 %v82
  %v147 = vunpack.c.l.b16 %v83
  %v148 = vunpack.c.h.b16 %v83
  %v149 = vunpack.c.l.b16 %v84
  %v150 = vunpack.c.h.b16 %v84
  %v151 = vunpack.c.l.b16 %v85
  %v152 = vunpack.c.h.b16 %v85
  %v153 = vunpack.c.l.b16 %v86
  %v154 = vunpack.c.h.b16 %v86
  %v155 = vunpack.c.l.b16 %v87
  %v156 = vunpack.c.h.b16 %v87
  %v157 = vunpack.c.l.b16 %v88
  %v158 = vunpack.c.h.b16 %v88
  %v159 = vunpack.c.l.b16 %v89
  %v160 = vunpack.c.h.b16 %v89
  %v161 = vunpack.c.l.b16 %v90
  %v162 = vunpack.c.h.b16 %v90
  %v163 = vunpack.c.l.b16 %v91
  %v164 = vunpack.c.h.b16 %v91
  %v165 = vunpack.c.l.b16 %v92
  %v166 = vunpack.c.h.b16 %v92
  %v167 = vunpack.c.l.b16 %v93
  %v168 = vunpack.c.h.b16 %v93
  %v169 = vunpack.c.l.b16 %v94
  %v170 = vunpack.c.h.b16 %v94
  %v171 = vunpack.c.l.b16 %v95
  %v172 = vunpack.c.h.b16 %v95
  %v173 = vunpack.c.l.b16 %v96
  %v174 = vunpack.c.h.b16 %v96
  %v175 = vunpack.c.l.b16 %v97
  %v176 = vunpack.c.h.b16 %v97
  %v177 = vunpack.c.l.b16 %v98
  %v178 = vunpack.c.h.b16 %v98
  %v179 = vunpack.c.l.b16 %v99
  %v180 = vunpack.c.h.b16 %v99
  %v181 = vpack.c.b16 %v137, %v135
  %v182 = vpack.c.b16 %v138, %v136
  %v183 = vpack.c.b16 %v141, %v139
  %v184 = vpack.c.b16 %v142, %v140
  %v185 = vpack.c.b16 %v145, %v143
  %v186 = vpack.c.b16 %v146, %v144
  %v187 = vpack.c.b16 %v149, %v147
  %v188 = vpack.c.b16 %v150, %v148
  %v189 = vpack.c.b16 %v153, %v151
  %v190 = vpack.c.b16 %v154, %v152
  %v191 = vpack.c.b16 %v157, %v155
  %v192 = vpack.c.b16 %v158, %v156
  %v193 = vpack.c.b16 %v161, %v159
  %v194 = vpack.c.b16 %v162, %v160
  %v195 = vpack.c.b16 %v165, %v163
  %v196 = vpack.c.b16 %v166, %v164
  %v197 = vpack.c.b16 %v169, %v167
  %v198 = vpack.c.b16 %v170, %v168
  %v199 = vpack.c.b16 %v173, %v171
  %v200 = vpack.c.b16 %v174, %v172
  %v201 = vpack.c.b16 %v177, %v175
  %v202 = vpack.c.b16 %v178, %v176
  %v203 = vpack.c.b16 %v179, %v179
  %v204 = vpack.c.b16 %v180, %v180
  %vm227 = vcmask 416768
  %v229 = vsel %vm227, %v62, 0
  %v232 = vsel %vm227, %v64, 0
  %v235 = vsel %vm227, %v66, 0
  %v238 = vsel %vm227, %v68, 0
  %v241 = vsel %vm227, %v70, 0
  %v244 = vsel %vm227, %v72, 0
  %v247 = vsel %vm227, %v74, 0
  %v250 = vsel %vm227, %v76, 0
  %vm252 = vcmask 1040384
  %vm253 = vcmask 1041408
  %v254 = vsel %vm252, 4294967295, 65535
  %v255 = vsel %vm253, %v254, 0
  %v257 = vand.u32 %v203, %v255
  %v260 = vand.u32 %v204, %v255
  %262 = vmatprep.subr.bf16.mxu0 %v182
  %263 = vmatpush1.bf16.msra.mxu0 %v181
  %264 = vmatprep.subr.bf16.mxu0 %v184
  %265 = vmatpush1.bf16.msra.mxu0 %v183
  %266 = vmatprep.subr.bf16.mxu0 %v186
  %267 = vmatpush1.bf16.msra.mxu0 %v185
  %268 = vmatprep.subr.bf16.mxu0 %v188
  %269 = vmatpush1.bf16.msra.mxu0 %v187
  %270 = vmatprep.subr.bf16.mxu0 %v190
  %271 = vmatpush1.bf16.msra.mxu0 %v189
  %272 = vmatprep.subr.bf16.mxu0 %v192
  %273 = vmatpush1.bf16.msra.mxu0 %v191
  %274 = vmatprep.subr.bf16.mxu0 %v194
  %275 = vmatpush1.bf16.msra.mxu0 %v193
  %276 = vmatprep.subr.bf16.mxu0 %v196
  %277 = vmatpush1.bf16.msra.mxu0 %v195
  %278 = vmatprep.subr.bf16.mxu0 %v198
  %279 = vmatpush1.bf16.msra.mxu0 %v197
  %280 = vmatprep.subr.bf16.mxu0 %v200
  %281 = vmatpush1.bf16.msra.mxu0 %v199
  %282 = vmatprep.subr.bf16.mxu0 %v202
  %283 = vmatpush1.bf16.msra.mxu0 %v201
  %284 = vmatprep.subr.bf16.mxu0 %v260
  %285 = vmatpush1.bf16.msra.mxu0 %v257
  %286 = vmatprep.subr.bf16.mxu0 0
  %287 = vmatpush1.bf16.msra.mxu0 0
  %288 = vmatprep.subr.bf16.mxu0 0
  %289 = vmatpush1.bf16.msra.mxu0 0
  %290 = vmatprep.subr.bf16.mxu0 0
  %291 = vmatpush1.bf16.msra.mxu0 0
  %292 = vmatprep.subr.bf16.mxu0 0
  %293 = vmatpush1.bf16.msra.mxu0 0
  %294 = vmatprep.mubr.bf16.mxu0 %v229
  %295 = vmatmul.mubr.bf16.gmra.mrb[0].mxu0 %v61
  %v296 = vpop.f32.mrb[0].mxu0
  %v297 = vadd.f32 %v105, %v296
  %v298 = vpop.f32.mrb[0].mxu0
  %v299 = vadd.f32 %v109, %v298
  %v300 = vpop.f32.mrb[0].mxu0
  %v301 = vadd.f32 %v105, %v300
  %v302 = vpop.f32.mrb[0].mxu0
  %v303 = vadd.f32 %v109, %v302
  %304 = vmatprep.mubr.bf16.mxu0 %v232
  %305 = vmatmul.mubr.bf16.gmra.mrb[0].mxu0 %v63
  %v306 = vpop.f32.mrb[0].mxu0
  %v307 = vadd.f32 %v105, %v306
  %v308 = vpop.f32.mrb[0].mxu0
  %v309 = vadd.f32 %v109, %v308
  %v310 = vpop.f32.mrb[0].mxu0
  %v311 = vadd.f32 %v105, %v310
  %v312 = vpop.f32.mrb[0].mxu0
  %v313 = vadd.f32 %v109, %v312
  %314 = vmatprep.mubr.bf16.mxu0 %v235
  %315 = vmatmul.mubr.bf16.gmra.mrb[0].mxu0 %v65
  %v316 = vpop.f32.mrb[0].mxu0
  %v317 = vadd.f32 %v105, %v316
  %v318 = vpop.f32.mrb[0].mxu0
  %v319 = vadd.f32 %v109, %v318
  %v320 = vpop.f32.mrb[0].mxu0
  %v321 = vadd.f32 %v105, %v320
  %v322 = vpop.f32.mrb[0].mxu0
  %v323 = vadd.f32 %v109, %v322
  %324 = vmatprep.mubr.bf16.mxu0 %v238
  %325 = vmatmul.mubr.bf16.gmra.mrb[0].mxu0 %v67
  %v326 = vpop.f32.mrb[0].mxu0
  %v327 = vadd.f32 %v105, %v326
  %v328 = vpop.f32.mrb[0].mxu0
  %v329 = vadd.f32 %v109, %v328
  %v330 = vpop.f32.mrb[0].mxu0
  %v331 = vadd.f32 %v105, %v330
  %v332 = vpop.f32.mrb[0].mxu0
  %v333 = vadd.f32 %v109, %v332
  %334 = vmatprep.mubr.bf16.mxu0 %v241
  %335 = vmatmul.mubr.bf16.gmra.mrb[0].mxu0 %v69
  %v336 = vpop.f32.mrb[0].mxu0
  %v337 = vadd.f32 %v105, %v336
  %v338 = vpop.f32.mrb[0].mxu0
  %v339 = vadd.f32 %v109, %v338
  %v340 = vpop.f32.mrb[0].mxu0
  %v341 = vadd.f32 %v105, %v340
  %v342 = vpop.f32.mrb[0].mxu0
  %v343 = vadd.f32 %v109, %v342
  %344 = vmatprep.mubr.bf16.mxu0 %v244
  %345 = vmatmul.mubr.bf16.gmra.mrb[0].mxu0 %v71
  %v346 = vpop.f32.mrb[0].mxu0
  %v347 = vadd.f32 %v105, %v346
  %v348 = vpop.f32.mrb[0].mxu0
  %v349 = vadd.f32 %v109, %v348
  %v350 = vpop.f32.mrb[0].mxu0
  %v351 = vadd.f32 %v105, %v350
  %v352 = vpop.f32.mrb[0].mxu0
  %v353 = vadd.f32 %v109, %v352
  %354 = vmatprep.mubr.bf16.mxu0 %v247
  %355 = vmatmul.mubr.bf16.gmra.mrb[0].mxu0 %v73
  %v356 = vpop.f32.mrb[0].mxu0
  %v357 = vadd.f32 %v105, %v356
  %v358 = vpop.f32.mrb[0].mxu0
  %v359 = vadd.f32 %v109, %v358
  %v360 = vpop.f32.mrb[0].mxu0
  %v361 = vadd.f32 %v105, %v360
  %v362 = vpop.f32.mrb[0].mxu0
  %v363 = vadd.f32 %v109, %v362
  %364 = vmatprep.mubr.bf16.mxu0 %v250
  %365 = vmatmul.mubr.bf16.gmra.mrb[0].mxu0 %v75
  %v366 = vpop.f32.mrb[0].mxu0
  %v367 = vadd.f32 %v105, %v366
  %v368 = vpop.f32.mrb[0].mxu0
  %v369 = vadd.f32 %v109, %v368
  %v370 = vpop.f32.mrb[0].mxu0
  %v371 = vadd.f32 %v105, %v370
  %v372 = vpop.f32.mrb[0].mxu0
  %v373 = vadd.f32 %v109, %v372
  %374 = vdwg.mxu0
  %v375 = vmax.f32 %v297, 0.0
  %v376 = vmax.f32 %v299, 0.0
  %v377 = vmax.f32 %v301, 0.0
  %v378 = vmax.f32 %v303, 0.0
  %v379 = vmax.f32 %v307, 0.0
  %v380 = vmax.f32 %v309, 0.0
  %v381 = vmax.f32 %v311, 0.0
  %v382 = vmax.f32 %v313, 0.0
  %v383 = vmax.f32 %v317, 0.0
  %v384 = vmax.f32 %v319, 0.0
  %v385 = vmax.f32 %v321, 0.0
  %v386 = vmax.f32 %v323, 0.0
  %v387 = vmax.f32 %v327, 0.0
  %v388 = vmax.f32 %v329, 0.0
  %v389 = vmax.f32 %v331, 0.0
  %v390 = vmax.f32 %v333, 0.0
  %v391 = vmax.f32 %v337, 0.0
  %v392 = vmax.f32 %v339, 0.0
  %v393 = vmax.f32 %v341, 0.0
  %v394 = vmax.f32 %v343, 0.0
  %v395 = vmax.f32 %v347, 0.0
  %v396 = vmax.f32 %v349, 0.0
  %v397 = vmax.f32 %v351, 0.0
  %v398 = vmax.f32 %v353, 0.0
  %v399 = vmax.f32 %v357, 0.0
  %v400 = vmax.f32 %v359, 0.0
  %v401 = vmax.f32 %v361, 0.0
  %v402 = vmax.f32 %v363, 0.0
  %v403 = vmax.f32 %v367, 0.0
  %v404 = vmax.f32 %v369, 0.0
  %v405 = vmax.f32 %v371, 0.0
  %v406 = vmax.f32 %v373, 0.0
  %v407 = vpack.c.bf16 %v377, %v375
  %v408 = vpack.c.bf16 %v378, %v376
  %v409 = vpack.c.bf16 %v381, %v379
  %v410 = vpack.c.bf16 %v382, %v380
  %v411 = vpack.c.bf16 %v385, %v383
  %v412 = vpack.c.bf16 %v386, %v384
  %v413 = vpack.c.bf16 %v389, %v387
  %v414 = vpack.c.bf16 %v390, %v388
  %v415 = vpack.c.bf16 %v393, %v391
  %v416 = vpack.c.bf16 %v394, %v392
  %v417 = vpack.c.bf16 %v397, %v395
  %v418 = vpack.c.bf16 %v398, %v396
  %v419 = vpack.c.bf16 %v401, %v399
  %v420 = vpack.c.bf16 %v402, %v400
  %v421 = vpack.c.bf16 %v405, %v403
  %v422 = vpack.c.bf16 %v406, %v404
  %v423 = vld [vmem:[%s3] sm:$0xff]
  %v424 = vld [vmem:[%s3 + $0x8] sm:$0xff]
  %v425 = vld [vmem:[%s3 + $0x10] sm:$0xff]
  %v426 = vld [vmem:[%s3 + $0x18] sm:$0xff]
  %v427 = vld [vmem:[%s3 + $0x20] sm:$0xff]
  %v428 = vld [vmem:[%s3 + $0x28] sm:$0xff]
  %v429 = vld [vmem:[%s3 + $0x30] sm:$0xff]
  %v430 = vld [vmem:[%s3 + $0x38] sm:$0xff]
  %v431 = vld [vmem:[%s3 + $0x40] sm:$0xff]
  %v432 = vld [vmem:[%s3 + $0x48] sm:$0xff]
  %v433 = vld [vmem:[%s3 + $0x50] sm:$0xff]
  %v434 = vld [vmem:[%s3 + $0x58] sm:$0xff]
  %v435 = vld [vmem:[%s3 + $0x60] sm:$0xff]
  %v436 = vld [vmem:[%s3 + $0x68] sm:$0xff]
  %v437 = vld [vmem:[%s3 + $0x70] sm:$0xff]
  %v438 = vld [vmem:[%s3 + $0x78] sm:$0xff]
  %v439 = vld [vmem:[%s3 + $0x80] sm:$0xff]
  %v440 = vld [vmem:[%s3 + $0x88] sm:$0xff]
  %v441 = vld [vmem:[%s3 + $0x90] sm:$0xff]
  %v442 = vld [vmem:[%s3 + $0x98] sm:$0xff]
  %v443 = vld [vmem:[%s3 + $0xa0] sm:$0xff]
  %v444 = vld [vmem:[%s3 + $0xa8] sm:$0xff]
  %v445 = vld [vmem:[%s3 + $0xb0] sm:$0xff]
  %v446 = vld [vmem:[%s3 + $0xb8] sm:$0xff]
  %v447 = vld [vmem:[%s3 + $0xc0] sm:$0xff]
  %v448 = vld [vmem:[%s3 + $0xc8] sm:$0xff]
  %v449 = vld [vmem:[%s3 + $0xd0] sm:$0xff]
  %v450 = vld [vmem:[%s3 + $0xd8] sm:$0xff]
  %v451 = vld [vmem:[%s3 + $0xe0] sm:$0xff]
  %v452 = vld [vmem:[%s3 + $0xe8] sm:$0xff]
  %v453 = vld [vmem:[%s3 + $0xf0] sm:$0xff]
  %v454 = vld [vmem:[%s3 + $0xf8] sm:$0xff]
  %v455 = vld [vmem:[%s4] sm:$0x3]
  %v457 = vlaneseq
  %v458 = vshrl.u32 %v457, 7
  %v459 = vsub.s32 0, %v458
  %v460 = vrot.slane %v455, %v459
  %v461 = vlaneseq
  %v462 = vshrl.u32 %v461, 7
  %v463 = vsub.s32 1, %v462
  %v464 = vrot.slane %v455, %v463
  %v499 = vunpack.c.l.b16 %v423
  %v500 = vunpack.c.h.b16 %v423
  %v501 = vunpack.c.l.b16 %v424
  %v502 = vunpack.c.h.b16 %v424
  %v503 = vunpack.c.l.b16 %v425
  %v504 = vunpack.c.h.b16 %v425
  %v505 = vunpack.c.l.b16 %v426
  %v506 = vunpack.c.h.b16 %v426
  %v507 = vunpack.c.l.b16 %v427
  %v508 = vunpack.c.h.b16 %v427
  %v509 = vunpack.c.l.b16 %v428
  %v510 = vunpack.c.h.b16 %v428
  %v511 = vunpack.c.l.b16 %v429
  %v512 = vunpack.c.h.b16 %v429
  %v513 = vunpack.c.l.b16 %v430
  %v514 = vunpack.c.h.b16 %v430
  %v515 = vunpack.c.l.b16 %v431
  %v516 = vunpack.c.h.b16 %v431
  %v517 = vunpack.c.l.b16 %v432
  %v518 = vunpack.c.h.b16 %v432
  %v519 = vunpack.c.l.b16 %v433
  %v520 = vunpack.c.h.b16 %v433
  %v521 = vunpack.c.l.b16 %v434
  %v522 = vunpack.c.h.b16 %v434
  %v523 = vunpack.c.l.b16 %v435
  %v524 = vunpack.c.h.b16 %v435
  %v525 = vunpack.c.l.b16 %v436
  %v526 = vunpack.c.h.b16 %v436
  %v527 = vunpack.c.l.b16 %v437
  %v528 = vunpack.c.h.b16 %v437
  %v529 = vunpack.c.l.b16 %v438
  %v530 = vunpack.c.h.b16 %v438
  %v531 = vunpack.c.l.b16 %v439
  %v532 = vunpack.c.h.b16 %v439
  %v533 = vunpack.c.l.b16 %v440
  %v534 = vunpack.c.h.b16 %v440
  %v535 = vunpack.c.l.b16 %v441
  %v536 = vunpack.c.h.b16 %v441
  %v537 = vunpack.c.l.b16 %v442
  %v538 = vunpack.c.h.b16 %v442
  %v539 = vunpack.c.l.b16 %v443
  %v540 = vunpack.c.h.b16 %v443
  %v541 = vunpack.c.l.b16 %v444
  %v542 = vunpack.c.h.b16 %v444
  %v543 = vunpack.c.l.b16 %v445
  %v544 = vunpack.c.h.b16 %v445
  %v545 = vunpack.c.l.b16 %v446
  %v546 = vunpack.c.h.b16 %v446
  %v547 = vunpack.c.l.b16 %v447
  %v548 = vunpack.c.h.b16 %v447
  %v549 = vunpack.c.l.b16 %v448
  %v550 = vunpack.c.h.b16 %v448
  %v551 = vunpack.c.l.b16 %v449
  %v552 = vunpack.c.h.b16 %v449
  %v553 = vunpack.c.l.b16 %v450
  %v554 = vunpack.c.h.b16 %v450
  %v555 = vunpack.c.l.b16 %v451
  %v556 = vunpack.c.h.b16 %v451
  %v557 = vunpack.c.l.b16 %v452
  %v558 = vunpack.c.h.b16 %v452
  %v559 = vunpack.c.l.b16 %v453
  %v560 = vunpack.c.h.b16 %v453
  %v561 = vunpack.c.l.b16 %v454
  %v562 = vunpack.c.h.b16 %v454
  %v563 = vpack.c.b16 %v501, %v499
  %v564 = vpack.c.b16 %v502, %v500
  %v565 = vpack.c.b16 %v505, %v503
  %v566 = vpack.c.b16 %v506, %v504
  %v567 = vpack.c.b16 %v509, %v507
  %v568 = vpack.c.b16 %v510, %v508
  %v569 = vpack.c.b16 %v513, %v511
  %v570 = vpack.c.b16 %v514, %v512
  %v571 = vpack.c.b16 %v517, %v515
  %v572 = vpack.c.b16 %v518, %v516
  %v573 = vpack.c.b16 %v521, %v519
  %v574 = vpack.c.b16 %v522, %v520
  %v575 = vpack.c.b16 %v525, %v523
  %v576 = vpack.c.b16 %v526, %v524
  %v577 = vpack.c.b16 %v529, %v527
  %v578 = vpack.c.b16 %v530, %v528
  %v579 = vpack.c.b16 %v533, %v531
  %v580 = vpack.c.b16 %v534, %v532
  %v581 = vpack.c.b16 %v537, %v535
  %v582 = vpack.c.b16 %v538, %v536
  %v583 = vpack.c.b16 %v541, %v539
  %v584 = vpack.c.b16 %v542, %v540
  %v585 = vpack.c.b16 %v545, %v543
  %v586 = vpack.c.b16 %v546, %v544
  %v587 = vpack.c.b16 %v549, %v547
  %v588 = vpack.c.b16 %v550, %v548
  %v589 = vpack.c.b16 %v553, %v551
  %v590 = vpack.c.b16 %v554, %v552
  %v591 = vpack.c.b16 %v557, %v555
  %v592 = vpack.c.b16 %v558, %v556
  %v593 = vpack.c.b16 %v561, %v559
  %v594 = vpack.c.b16 %v562, %v560
  %627 = vmatprep.subr.bf16.mxu0 %v564
  %628 = vmatpush1.bf16.msra.mxu0 %v563
  %629 = vmatprep.subr.bf16.mxu0 %v566
  %630 = vmatpush1.bf16.msra.mxu0 %v565
  %631 = vmatprep.subr.bf16.mxu0 %v568
  %632 = vmatpush1.bf16.msra.mxu0 %v567
  %633 = vmatprep.subr.bf16.mxu0 %v570
  %634 = vmatpush1.bf16.msra.mxu0 %v569
  %635 = vmatprep.subr.bf16.mxu0 %v572
  %636 = vmatpush1.bf16.msra.mxu0 %v571
  %637 = vmatprep.subr.bf16.mxu0 %v574
  %638 = vmatpush1.bf16.msra.mxu0 %v573
  %639 = vmatprep.subr.bf16.mxu0 %v576
  %640 = vmatpush1.bf16.msra.mxu0 %v575
  %641 = vmatprep.subr.bf16.mxu0 %v578
  %642 = vmatpush1.bf16.msra.mxu0 %v577
  %643 = vmatprep.subr.bf16.mxu0 %v580
  %644 = vmatpush1.bf16.msra.mxu0 %v579
  %645 = vmatprep.subr.bf16.mxu0 %v582
  %646 = vmatpush1.bf16.msra.mxu0 %v581
  %647 = vmatprep.subr.bf16.mxu0 %v584
  %648 = vmatpush1.bf16.msra.mxu0 %v583
  %649 = vmatprep.subr.bf16.mxu0 %v586
  %650 = vmatpush1.bf16.msra.mxu0 %v585
  %651 = vmatprep.subr.bf16.mxu0 %v588
  %652 = vmatpush1.bf16.msra.mxu0 %v587
  %653 = vmatprep.subr.bf16.mxu0 %v590
  %654 = vmatpush1.bf16.msra.mxu0 %v589
  %655 = vmatprep.subr.bf16.mxu0 %v592
  %656 = vmatpush1.bf16.msra.mxu0 %v591
  %657 = vmatprep.subr.bf16.mxu0 %v594
  %658 = vmatpush1.bf16.msra.mxu0 %v593
  %659 = vmatprep.mubr.bf16.mxu0 %v408
  %660 = vmatmul.mubr.bf16.gmra.mrb[0].mxu0 %v407
  %v661 = vpop.f32.mrb[0].mxu0
  %v662 = vadd.f32 %v460, %v661
  %v663 = vpop.f32.mrb[0].mxu0
  %v664 = vadd.f32 %v464, %v663
  %v665 = vpop.f32.mrb[0].mxu0
  %v666 = vadd.f32 %v460, %v665
  %v667 = vpop.f32.mrb[0].mxu0
  %v668 = vadd.f32 %v464, %v667
  %669 = vmatprep.mubr.bf16.mxu0 %v410
  %670 = vmatmul.mubr.bf16.gmra.mrb[0].mxu0 %v409
  %v671 = vpop.f32.mrb[0].mxu0
  %v672 = vadd.f32 %v460, %v671
  %v673 = vpop.f32.mrb[0].mxu0
  %v674 = vadd.f32 %v464, %v673
  %v675 = vpop.f32.mrb[0].mxu0
  %v676 = vadd.f32 %v460, %v675
  %v677 = vpop.f32.mrb[0].mxu0
  %v678 = vadd.f32 %v464, %v677
  %679 = vmatprep.mubr.bf16.mxu0 %v412
  %680 = vmatmul.mubr.bf16.gmra.mrb[0].mxu0 %v411
  %v681 = vpop.f32.mrb[0].mxu0
  %v682 = vadd.f32 %v460, %v681
  %v683 = vpop.f32.mrb[0].mxu0
  %v684 = vadd.f32 %v464, %v683
  %v685 = vpop.f32.mrb[0].mxu0
  %v686 = vadd.f32 %v460, %v685
  %v687 = vpop.f32.mrb[0].mxu0
  %v688 = vadd.f32 %v464, %v687
  %689 = vmatprep.mubr.bf16.mxu0 %v414
  %690 = vmatmul.mubr.bf16.gmra.mrb[0].mxu0 %v413
  %v691 = vpop.f32.mrb[0].mxu0
  %v692 = vadd.f32 %v460, %v691
  %v693 = vpop.f32.mrb[0].mxu0
  %v694 = vadd.f32 %v464, %v693
  %v695 = vpop.f32.mrb[0].mxu0
  %v696 = vadd.f32 %v460, %v695
  %v697 = vpop.f32.mrb[0].mxu0
  %v698 = vadd.f32 %v464, %v697
  %699 = vmatprep.mubr.bf16.mxu0 %v416
  %700 = vmatmul.mubr.bf16.gmra.mrb[0].mxu0 %v415
  %v701 = vpop.f32.mrb[0].mxu0
  %v702 = vadd.f32 %v460, %v701
  %v703 = vpop.f32.mrb[0].mxu0
  %v704 = vadd.f32 %v464, %v703
  %v705 = vpop.f32.mrb[0].mxu0
  %v706 = vadd.f32 %v460, %v705
  %v707 = vpop.f32.mrb[0].mxu0
  %v708 = vadd.f32 %v464, %v707
  %709 = vmatprep.mubr.bf16.mxu0 %v418
  %710 = vmatmul.mubr.bf16.gmra.mrb[0].mxu0 %v417
  %v711 = vpop.f32.mrb[0].mxu0
  %v712 = vadd.f32 %v460, %v711
  %v713 = vpop.f32.mrb[0].mxu0
  %v714 = vadd.f32 %v464, %v713
  %v715 = vpop.f32.mrb[0].mxu0
  %v716 = vadd.f32 %v460, %v715
  %v717 = vpop.f32.mrb[0].mxu0
  %v718 = vadd.f32 %v464, %v717
  %719 = vmatprep.mubr.bf16.mxu0 %v420
  %720 = vmatmul.mubr.bf16.gmra.mrb[0].mxu0 %v419
  %v721 = vpop.f32.mrb[0].mxu0
  %v722 = vadd.f32 %v460, %v721
  %v723 = vpop.f32.mrb[0].mxu0
  %v724 = vadd.f32 %v464, %v723
  %v725 = vpop.f32.mrb[0].mxu0
  %v726 = vadd.f32 %v460, %v725
  %v727 = vpop.f32.mrb[0].mxu0
  %v728 = vadd.f32 %v464, %v727
  %729 = vmatprep.mubr.bf16.mxu0 %v422
  %730 = vmatmul.mubr.bf16.gmra.mrb[0].mxu0 %v421
  %v731 = vpop.f32.mrb[0].mxu0
  %v732 = vadd.f32 %v460, %v731
  %v733 = vpop.f32.mrb[0].mxu0
  %v734 = vadd.f32 %v464, %v733
  %v735 = vpop.f32.mrb[0].mxu0
  %v736 = vadd.f32 %v460, %v735
  %v737 = vpop.f32.mrb[0].mxu0
  %v738 = vadd.f32 %v464, %v737
  %739 = vdwg.mxu0
  %v740 = vmax.f32 %v662, 0.0
  %v741 = vmax.f32 %v664, 0.0
  %v742 = vmax.f32 %v666, 0.0
  %v743 = vmax.f32 %v668, 0.0
  %v744 = vmax.f32 %v672, 0.0
  %v745 = vmax.f32 %v674, 0.0
  %v746 = vmax.f32 %v676, 0.0
  %v747 = vmax.f32 %v678, 0.0
  %v748 = vmax.f32 %v682, 0.0
  %v749 = vmax.f32 %v684, 0.0
  %v750 = vmax.f32 %v686, 0.0
  %v751 = vmax.f32 %v688, 0.0
  %v752 = vmax.f32 %v692, 0.0
  %v753 = vmax.f32 %v694, 0.0
  %v754 = vmax.f32 %v696, 0.0
  %v755 = vmax.f32 %v698, 0.0
  %v756 = vmax.f32 %v702, 0.0
  %v757 = vmax.f32 %v704, 0.0
  %v758 = vmax.f32 %v706, 0.0
  %v759 = vmax.f32 %v708, 0.0
  %v760 = vmax.f32 %v712, 0.0
  %v761 = vmax.f32 %v714, 0.0
  %v762 = vmax.f32 %v716, 0.0
  %v763 = vmax.f32 %v718, 0.0
  %v764 = vmax.f32 %v722, 0.0
  %v765 = vmax.f32 %v724, 0.0
  %v766 = vmax.f32 %v726, 0.0
  %v767 = vmax.f32 %v728, 0.0
  %v768 = vmax.f32 %v732, 0.0
  %v769 = vmax.f32 %v734, 0.0
  %v770 = vmax.f32 %v736, 0.0
  %v771 = vmax.f32 %v738, 0.0
  %v772 = vld [vmem:[%s5] sm:$0x3]
  %v774 = vlaneseq
  %v775 = vshrl.u32 %v774, 7
  %v776 = vsub.s32 0, %v775
  %v777 = vrot.slane %v772, %v776
  %v778 = vlaneseq
  %v779 = vshrl.u32 %v778, 7
  %v780 = vsub.s32 1, %v779
  %v781 = vrot.slane %v772, %v780
  %v784 = vmul.f32 %v740, %v777
  %v785 = vmul.f32 %v741, %v781
  %v786 = vmul.f32 %v742, %v777
  %v787 = vmul.f32 %v743, %v781
  %v788 = vmul.f32 %v744, %v777
  %v789 = vmul.f32 %v745, %v781
  %v790 = vmul.f32 %v746, %v777
  %v791 = vmul.f32 %v747, %v781
  %v792 = vmul.f32 %v748, %v777
  %v793 = vmul.f32 %v749, %v781
  %v794 = vmul.f32 %v750, %v777
  %v795 = vmul.f32 %v751, %v781
  %v796 = vmul.f32 %v752, %v777
  %v797 = vmul.f32 %v753, %v781
  %v798 = vmul.f32 %v754, %v777
  %v799 = vmul.f32 %v755, %v781
  %v800 = vmul.f32 %v756, %v777
  %v801 = vmul.f32 %v757, %v781
  %v802 = vmul.f32 %v758, %v777
  %v803 = vmul.f32 %v759, %v781
  %v804 = vmul.f32 %v760, %v777
  %v805 = vmul.f32 %v761, %v781
  %v806 = vmul.f32 %v762, %v777
  %v807 = vmul.f32 %v763, %v781
  %v808 = vmul.f32 %v764, %v777
  %v809 = vmul.f32 %v765, %v781
  %v810 = vmul.f32 %v766, %v777
  %v811 = vmul.f32 %v767, %v781
  %v812 = vmul.f32 %v768, %v777
  %v813 = vmul.f32 %v769, %v781
  %v814 = vmul.f32 %v770, %v777
  %v815 = vmul.f32 %v771, %v781
  %v816 = vadd.f32 %v784, %v785
  %817 = vadd.xlane.f32.xlu0 %v816
  %v818 = vpop.xlane.xlu0 %817
  %v819 = vadd.f32 %v786, %v787
  %820 = vadd.xlane.f32.xlu0 %v819
  %v821 = vpop.xlane.xlu0 %820
  %v822 = vadd.f32 %v788, %v789
  %823 = vadd.xlane.f32.xlu0 %v822
  %v824 = vpop.xlane.xlu0 %823
  %v825 = vadd.f32 %v790, %v791
  %826 = vadd.xlane.f32.xlu0 %v825
  %v827 = vpop.xlane.xlu0 %826
  %v828 = vadd.f32 %v792, %v793
  %829 = vadd.xlane.f32.xlu0 %v828
  %v830 = vpop.xlane.xlu0 %829
  %v831 = vadd.f32 %v794, %v795
  %832 = vadd.xlane.f32.xlu0 %v831
  %v833 = vpop.xlane.xlu0 %832
  %v834 = vadd.f32 %v796, %v797
  %835 = vadd.xlane.f32.xlu0 %v834
  %v836 = vpop.xlane.xlu0 %835
  %v837 = vadd.f32 %v798, %v799
  %838 = vadd.xlane.f32.xlu0 %v837
  %v839 = vpop.xlane.xlu0 %838
  %v840 = vadd.f32 %v800, %v801
  %841 = vadd.xlane.f32.xlu0 %v840
  %v842 = vpop.xlane.xlu0 %841
  %v843 = vadd.f32 %v802, %v803
  %844 = vadd.xlane.f32.xlu0 %v843
  %v845 = vpop.xlane.xlu0 %844
  %v846 = vadd.f32 %v804, %v805
  %847 = vadd.xlane.f32.xlu0 %v846
  %v848 = vpop.xlane.xlu0 %847
  %v849 = vadd.f32 %v806, %v807
  %850 = vadd.xlane.f32.xlu0 %v849
  %v851 = vpop.xlane.xlu0 %850
  %v852 = vadd.f32 %v808, %v809
  %853 = vadd.xlane.f32.xlu0 %v852
  %v854 = vpop.xlane.xlu0 %853
  %v855 = vadd.f32 %v810, %v811
  %856 = vadd.xlane.f32.xlu0 %v855
  %v857 = vpop.xlane.xlu0 %856
  %v858 = vadd.f32 %v812, %v813
  %859 = vadd.xlane.f32.xlu0 %v858
  %v860 = vpop.xlane.xlu0 %859
  %v861 = vadd.f32 %v814, %v815
  %862 = vadd.xlane.f32.xlu0 %v861
  %v863 = vpop.xlane.xlu0 %862
  %v864 = vld [vmem:[#allocation2] sm:$0x1]
  %866 = vset.pattern.permute.xlu0 0
  %867 = vperm.xlu0 %866, %v864
  %v868 = vpop.permute.xlu0 %867
  %v870 = vlaneseq
  %v871 = vshrl.u32 %v870, 7
  %v872 = vsub.s32 0, %v871
  %v873 = vrot.slane %v868, %v872
  %v874 = vadd.f32 %v818, %v873
  %v875 = vadd.f32 %v821, %v873
  %v876 = vadd.f32 %v824, %v873
  %v877 = vadd.f32 %v827, %v873
  %v878 = vadd.f32 %v830, %v873
  %v879 = vadd.f32 %v833, %v873
  %v880 = vadd.f32 %v836, %v873
  %v881 = vadd.f32 %v839, %v873
  %v882 = vadd.f32 %v842, %v873
  %v883 = vadd.f32 %v845, %v873
  %v884 = vadd.f32 %v848, %v873
  %v885 = vadd.f32 %v851, %v873
  %v886 = vadd.f32 %v854, %v873
  %v887 = vadd.f32 %v857, %v873
  %v888 = vadd.f32 %v860, %v873
  %v889 = vadd.f32 %v863, %v873
  %v906 = vlaneseq
  %v907 = vand.u32 %v906, 127
  %v908 = vlaneseq
  %v909 = vshrl.u32 %v908, 7
  %v910 = vsub.s32 %v907, %v909
  %v911 = vrot.slane %v874, %v910
  %v912 = vadd.s32 %v907, 4294967288
  %v913 = vlaneseq
  %v914 = vshrl.u32 %v913, 7
  %v915 = vsub.s32 %v912, %v914
  %v916 = vrot.slane %v875, %v915
  %vm917 = vcmask 130112
  %v918 = vsel %vm917, %v916, %v911
  %v919 = vadd.s32 %v907, 4294967280
  %v920 = vlaneseq
  %v921 = vshrl.u32 %v920, 7
  %v922 = vsub.s32 %v919, %v921
  %v923 = vrot.slane %v876, %v922
  %vm924 = vcmask 195712
  %v925 = vsel %vm924, %v923, %v918
  %v926 = vadd.s32 %v907, 4294967272
  %v927 = vlaneseq
  %v928 = vshrl.u32 %v927, 7
  %v929 = vsub.s32 %v926, %v928
  %v930 = vrot.slane %v877, %v929
  %vm931 = vcmask 261312
  %v932 = vsel %vm931, %v930, %v925
  %v933 = vadd.s32 %v907, 4294967264
  %v934 = vlaneseq
  %v935 = vshrl.u32 %v934, 7
  %v936 = vsub.s32 %v933, %v935
  %v937 = vrot.slane %v878, %v936
  %vm938 = vcmask 326912
  %v939 = vsel %vm938, %v937, %v932
  %v940 = vadd.s32 %v907, 4294967256
  %v941 = vlaneseq
  %v942 = vshrl.u32 %v941, 7
  %v943 = vsub.s32 %v940, %v942
  %v944 = vrot.slane %v879, %v943
  %vm945 = vcmask 392512
  %v946 = vsel %vm945, %v944, %v939
  %v947 = vadd.s32 %v907, 4294967248
  %v948 = vlaneseq
  %v949 = vshrl.u32 %v948, 7
  %v950 = vsub.s32 %v947, %v949
  %v951 = vrot.slane %v880, %v950
  %vm952 = vcmask 458112
  %v953 = vsel %vm952, %v951, %v946
  %v954 = vadd.s32 %v907, 4294967240
  %v955 = vlaneseq
  %v956 = vshrl.u32 %v955, 7
  %v957 = vsub.s32 %v954, %v956
  %v958 = vrot.slane %v881, %v957
  %vm959 = vcmask 523712
  %v960 = vsel %vm959, %v958, %v953
  %v961 = vadd.s32 %v907, 4294967232
  %v962 = vlaneseq
  %v963 = vshrl.u32 %v962, 7
  %v964 = vsub.s32 %v961, %v963
  %v965 = vrot.slane %v882, %v964
  %vm966 = vcmask 589312
  %v967 = vsel %vm966, %v965, %v960
  %v968 = vadd.s32 %v907, 4294967224
  %v969 = vlaneseq
  %v970 = vshrl.u32 %v969, 7
  %v971 = vsub.s32 %v968, %v970
  %v972 = vrot.slane %v883, %v971
  %vm973 = vcmask 654912
  %v974 = vsel %vm973, %v972, %v967
  %v975 = vadd.s32 %v907, 4294967216
  %v976 = vlaneseq
  %v977 = vshrl.u32 %v976, 7
  %v978 = vsub.s32 %v975, %v977
  %v979 = vrot.slane %v884, %v978
  %vm980 = vcmask 720512
  %v981 = vsel %vm980, %v979, %v974
  %v982 = vadd.s32 %v907, 4294967208
  %v983 = vlaneseq
  %v984 = vshrl.u32 %v983, 7
  %v985 = vsub.s32 %v982, %v984
  %v986 = vrot.slane %v885, %v985
  %vm987 = vcmask 786112
  %v988 = vsel %vm987, %v986, %v981
  %v989 = vadd.s32 %v907, 4294967200
  %v990 = vlaneseq
  %v991 = vshrl.u32 %v990, 7
  %v992 = vsub.s32 %v989, %v991
  %v993 = vrot.slane %v886, %v992
  %vm994 = vcmask 851712
  %v995 = vsel %vm994, %v993, %v988
  %v996 = vadd.s32 %v907, 4294967192
  %v997 = vlaneseq
  %v998 = vshrl.u32 %v997, 7
  %v999 = vsub.s32 %v996, %v998
  %v1000 = vrot.slane %v887, %v999
  %vm1001 = vcmask 917312
  %v1002 = vsel %vm1001, %v1000, %v995
  %v1003 = vadd.s32 %v907, 4294967184
  %v1004 = vlaneseq
  %v1005 = vshrl.u32 %v1004, 7
  %v1006 = vsub.s32 %v1003, %v1005
  %v1007 = vrot.slane %v888, %v1006
  %vm1008 = vcmask 982912
  %v1009 = vsel %vm1008, %v1007, %v1002
  %v1010 = vadd.s32 %v907, 4294967176
  %v1011 = vlaneseq
  %v1012 = vshrl.u32 %v1011, 7
  %v1013 = vsub.s32 %v1010, %v1012
  %v1014 = vrot.slane %v889, %v1013
  %vm1015 = vcmask 1048512
  %v1016 = vsel %vm1015, %v1014, %v1009
  %1018 = vst [vmem:[%s7] sm:$0x1] %v1016
  // Predicated region
  $region30: #{declaration_model_forward.1} parent=0 // pred_check
    _
  $region31: #{declaration_model_forward.1} parent=0 // pred_check_branch
    %1020 = sbr.rel (0) target = $region33
  $region32: #{declaration_model_forward.1} parent=0 // pred_region
    _
  $region33: #{declaration_model_forward.1} parent=0 // pred_fallthru
    _
  // Predicated region
  $region34: #{declaration_model_forward.1} parent=0 // pred_check
    _
  $region35: #{declaration_model_forward.1} parent=0 // pred_check_branch
    %1022 = sbr.rel (0) target = $region37
  $region36: #{declaration_model_forward.1} parent=0 // pred_region
    _
  $region37: #{declaration_model_forward.1} parent=0 // pred_fallthru
    _

</llo_original>
